<compile_context>
chip_gen: v5e
topology: v5e:2x2
jax: 0.10.0
libtpu: 0.0.40
codegen_flags: <defaults>
</compile_context>

<pallas_src>
import jax
import jax.numpy as jnp
from jax.experimental import pallas as pl
from jax.experimental.pallas import tpu as pltpu

NUM_CLASSES = 18
FEAT_DIM = 2048
H1_DIM = 512
H2_DIM = 256
N_PAD = 128            # lane-dense padded output width (>= NUM_CLASSES)


def _round_up(x, m):
    return ((x + m - 1) // m) * m


def _fused_kernel(img_ref, w1_ref, b1_ref, w2_ref, b2_ref, w3_ref, b3_ref,
                  out_ref, pool_acc):
    """Grid = (batch tiles, spatial chunks).

    img_ref  : (TB, C_pad, HW_CHUNK)  image chunk (f32 or bf16)
    w1_ref   : (C_pad, 512)  bf16     backbone projection + 1/HW folded into fc1
    w2_ref   : (512, 256)    bf16
    w3_ref   : (256, 128)    bf16     padded to 128 lanes (cols >= 18 are zero)
    b*_ref   : (1, D)        f32
    out_ref  : (TB, 128)     f32      resident across the spatial axis
    pool_acc : (TB, C_pad)   f32      VMEM scratch pool accumulator
    """
    k = pl.program_id(1)

    @pl.when(k == 0)
    def _():
        pool_acc[...] = jnp.zeros_like(pool_acc)

    # Partial spatial sum for this chunk; accumulate in f32 (1/HW is folded into w1).
    pool_acc[...] += jnp.sum(img_ref[...].astype(jnp.float32), axis=-1)

    @pl.when(k == pl.num_programs(1) - 1)
    def _():
        pooled = pool_acc[...]                                          # (TB, C_pad)

        # fc1 (backbone projection + GAP scale folded in): Linear -> Dropout(id) -> ReLU
        h1 = jnp.dot(pooled.astype(jnp.bfloat16), w1_ref[...],
                     preferred_element_type=jnp.float32) + b1_ref[...]
        h1 = jnp.maximum(h1, 0.0)

        # fc2: Linear(512, 256) -> ReLU
        h2 = jnp.dot(h1.astype(jnp.bfloat16), w2_ref[...],
                     preferred_element_type=jnp.float32) + b2_ref[...]
        h2 = jnp.maximum(h2, 0.0)

        # fc3: Linear(256, 128-padded); unmasked lane-dense store.
        logits = jnp.dot(h2.astype(jnp.bfloat16), w3_ref[...],
                         preferred_element_type=jnp.float32) + b3_ref[...]
        out_ref[...] = logits.astype(out_ref.dtype)


def prepare_params(params, hw):
    """Fold GAP scale + linear backbone stand-in into fc1, pad C and fc3, cast to bf16."""
    wp, bp = params["wp"], params["bp"]
    w1, b1 = params["w1"], params["b1"]
    c = wp.shape[0]
    c_pad = _round_up(max(c, 1), 8)

    # TODO(synk): folding only valid while image_model is the linear GAP stand-in.
    w1f = (wp / float(hw)) @ w1                     # (C, 512), 1/HW folded in
    b1f = bp @ w1 + b1                              # (1, 512)
    w1f = jnp.zeros((c_pad, H1_DIM), jnp.float32).at[:c, :].set(w1f)

    w3, b3 = params["w3"], params["b3"]
    w3p = jnp.zeros((H2_DIM, N_PAD), jnp.float32).at[:, :NUM_CLASSES].set(w3)
    b3p = jnp.zeros((1, N_PAD), jnp.float32).at[:, :NUM_CLASSES].set(b3)

    return dict(
        w1=w1f.astype(jnp.bfloat16), b1=b1f.astype(jnp.float32),
        w2=params["w2"].astype(jnp.bfloat16), b2=params["b2"].astype(jnp.float32),
        w3=w3p.astype(jnp.bfloat16), b3=b3p.astype(jnp.float32),
    )


def _vmem_capacity_bytes():
    try:
        return int(pltpu.get_tpu_info().vmem_capacity_bytes)
    except Exception:
        return 64 << 20        # conservative fallback (v7x per-TC capacity)


def image_only_model_forward(input_ids, attention_mask, image, prepped):
    """Mirrors ImageOnlyModel.forward(input_ids, attention_mask, image).

    input_ids / attention_mask are accepted for signature parity but unused,
    exactly as in the PyTorch forward.
    """
    del input_ids, attention_mask  # unused by the PyTorch module as well
    B, C, H, W = image.shape
    HW = H * W
    itemsize = image.dtype.itemsize   # bf16 producers halve image traffic for free

    w1, b1 = prepped["w1"], prepped["b1"]
    w2, b2 = prepped["w2"], prepped["b2"]
    w3, b3 = prepped["w3"], prepped["b3"]
    C_PAD = w1.shape[0]
    assert C_PAD >= C and C_PAD % 8 == 0

    # ---- batch tiling: sublane-aligned, capped at MXU row height, >=2 blocks when
    # ---- possible so v7x megacore has work on both cores.
    B_pad0 = _round_up(B, 8)
    if B_pad0 >= 16:
        TB = min(128, _round_up(pl.cdiv(B_pad0, 2), 8))
    else:
        TB = B_pad0
    B_pad = _round_up(B, TB)

    # ---- VMEM-aware spatial chunk size.
    weight_bytes = sum(int(a.size) * a.dtype.itemsize
                       for a in (w1, b1, w2, b2, w3, b3))
    vmem_cap = _vmem_capacity_bytes()
    # Tight on v7x (64 MiB total -> ~45 MiB), generous on v5e/v6e (128 MiB -> ~90 MiB).
    vmem_target = min(int(vmem_cap * 0.70), 96 << 20)

    # weights resident + double-buffered output tile + pool scratch + headroom
    fixed_bytes = weight_bytes + 2 * TB * N_PAD * 4 + TB * C_PAD * 4 + (2 << 20)
    avail = max(vmem_target - fixed_bytes, 2 * TB * C_PAD * 128 * itemsize)
    hw_max = avail // (2 * TB * C_PAD * itemsize)          # double-buffered image tile
    HW_CHUNK = max(128, min(8192, (hw_max // 128) * 128))
    HW_CHUNK = min(HW_CHUNK, _round_up(HW, 128))
    HW_pad = _round_up(HW, HW_CHUNK)
    n_hw = HW_pad // HW_CHUNK

    # ---- pad the image once: batch to TB, channels to sublane multiple, HW to chunks.
    img = image.reshape(B, C, HW)
    if (B_pad - B) or (C_PAD - C) or (HW_pad - HW):
        img = jnp.pad(img, ((0, B_pad - B), (0, C_PAD - C), (0, HW_pad - HW)))
    grid = (B_pad // TB, n_hw)

    def const_spec(a):
        nd = a.ndim
        return pl.BlockSpec(a.shape, lambda b, k, _n=nd: (0,) * _n)

    img_step_bytes = TB * C_PAD * HW_CHUNK * itemsize
    vmem_request = int(max(2 * img_step_bytes + fixed_bytes, 8 << 20))
    vmem_request = int(min(vmem_request, vmem_cap))

    flops = (B_pad * C_PAD * HW_pad                                   # pool adds
             + 2 * B_pad * (C_PAD * H1_DIM + H1_DIM * H2_DIM + H2_DIM * N_PAD))
    bytes_accessed = (B_pad * C_PAD * HW_pad * itemsize + weight_bytes
                      + B_pad * N_PAD * 4)

    out = pl.pallas_call(
        _fused_kernel,
        out_shape=jax.ShapeDtypeStruct((B_pad, N_PAD), jnp.float32),
        grid=grid,
        in_specs=[
            pl.BlockSpec((TB, C_PAD, HW_CHUNK), lambda b, k: (b, 0, k)),  # image stream
            const_spec(w1), const_spec(b1),                               # VMEM-resident
            const_spec(w2), const_spec(b2),
            const_spec(w3), const_spec(b3),
        ],
        out_specs=pl.BlockSpec((TB, N_PAD), lambda b, k: (b, 0)),         # resident over k
        scratch_shapes=[pltpu.VMEM((TB, C_PAD), jnp.float32)],            # pool accumulator
        compiler_params=pltpu.CompilerParams(
            dimension_semantics=("parallel", "arbitrary"),
            vmem_limit_bytes=vmem_request,
        ),
        cost_estimate=pl.CostEstimate(
            flops=flops, transcendentals=0, bytes_accessed=bytes_accessed),
    )(img, w1, b1, w2, b2, w3, b3)

    return out[:B, :NUM_CLASSES]


def init_params(key, in_channels):
    """Deterministic parameter init (shapes implied by the module __init__), f32."""
    ks = jax.random.split(key, 8)

    def linear(kw, kb, d_in, d_out):
        w = jax.random.normal(kw, (d_in, d_out), jnp.float32) * (1.0 / jnp.sqrt(d_in))
        b = jax.random.normal(kb, (1, d_out), jnp.float32) * 0.01
        return w, b

    wp, bp = linear(ks[0], ks[1], in_channels, FEAT_DIM)   # backbone stand-in projection
    w1, b1 = linear(ks[2], ks[3], FEAT_DIM, H1_DIM)        # nn.Linear(2048, 512)
    w2, b2 = linear(ks[4], ks[5], H1_DIM, H2_DIM)          # nn.Linear(512, 256)
    w3, b3 = linear(ks[6], ks[7], H2_DIM, NUM_CLASSES)     # nn.Linear(256, 18)
    return dict(wp=wp, bp=bp, w1=w1, b1=b1, w2=w2, b2=b2, w3=w3, b3=b3)


def reference_forward_f32(image, params):
    """Pure-JAX f32 reference of the original (unfused, unpadded) module."""
    pooled = jnp.mean(image.astype(jnp.float32), axis=(2, 3))
    feats = pooled @ params["wp"] + params["bp"]
    h1 = jnp.maximum(feats @ params["w1"] + params["b1"], 0.0)
    h2 = jnp.maximum(h1 @ params["w2"] + params["b2"], 0.0)
    return h2 @ params["w3"] + params["b3"]


def reference_forward_prepped(image, prepped):
    """Pure-JAX reference using the exact same folded/bf16/padded params as the kernel."""
    B, C, H, W = image.shape
    pooled = jnp.sum(image.astype(jnp.float32).reshape(B, C, H * W), axis=-1)
    c_pad = prepped["w1"].shape[0]
    pooled = jnp.pad(pooled, ((0, 0), (0, c_pad - C)))
    h1 = jnp.maximum(
        jnp.dot(pooled.astype(jnp.bfloat16), prepped["w1"],
                preferred_element_type=jnp.float32) + prepped["b1"], 0.0)
    h2 = jnp.maximum(
        jnp.dot(h1.astype(jnp.bfloat16), prepped["w2"],
                preferred_element_type=jnp.float32) + prepped["b2"], 0.0)
    logits = jnp.dot(h2.astype(jnp.bfloat16), prepped["w3"],
                     preferred_element_type=jnp.float32) + prepped["b3"]
    return logits[:, :NUM_CLASSES]


if __name__ == "__main__":
    key = jax.random.PRNGKey(0)
    k_img, k_ids, k_params = jax.random.split(key, 3)

    # Small example shapes: batch=2, channels=4, spatial=16x16, seq=8 (text inputs unused).
    B, C, H, W, S = 2, 4, 16, 16, 8
    image = jax.random.normal(k_img, (B, C, H, W), jnp.float32)          # NCHW
    input_ids = jax.random.randint(k_ids, (B, S), 0, 1000, jnp.int32)    # ignored by forward
    attention_mask = jnp.ones((B, S), jnp.int32)                          # ignored by forward

    params = init_params(k_params, C)
    prepped = prepare_params(params, H * W)

    out = image_only_model_forward(input_ids, attention_mask, image, prepped)
    out = jax.block_until_ready(out)
    assert out.shape == (B, NUM_CLASSES), out.shape

    # Tight check against a pure-JAX version of the exact kernel math (same folded params).
    ref_same = reference_forward_prepped(image, prepped)
    assert jnp.allclose(out, ref_same, atol=2e-3, rtol=2e-3), "mismatch vs prepped reference"

    # Looser check against the original f32 unfused module math (bf16 rounding error only).
    ref_f32 = reference_forward_f32(image, params)
    assert jnp.allclose(out, ref_f32, atol=3e-2, rtol=3e-2), "mismatch vs f32 reference"

    print("KERNEL_OK")
</pallas_src>

<mosaic_0001>
module attributes {stable_mosaic.version = 11 : i64} {
  func.func @_fused_kernel(%arg0: i32, %arg1: i32, %arg2: memref<8x8x256xf32, #tpu.memory_space<vmem>>, %arg3: memref<8x512xbf16, #tpu.memory_space<vmem>>, %arg4: memref<1x512xf32, #tpu.memory_space<vmem>>, %arg5: memref<512x256xbf16, #tpu.memory_space<vmem>>, %arg6: memref<1x256xf32, #tpu.memory_space<vmem>>, %arg7: memref<256x128xbf16, #tpu.memory_space<vmem>>, %arg8: memref<1x128xf32, #tpu.memory_space<vmem>>, %arg9: memref<8x128xf32, #tpu.memory_space<vmem>>, %arg10: memref<8x8xf32, #tpu.memory_space<vmem>>) attributes {dimension_semantics = [#tpu.dimension_semantics<parallel>, #tpu.dimension_semantics<arbitrary>], iteration_bounds = array<i64: 1, 1>, scalar_prefetch = 0 : i64, scratch_operands = 1 : i64, tpu.core_type = #tpu.core_type<tc>, window_params = [{transform_indices = @transform_0, window_bounds = array<i64: 8, 8, 256>}, {pipeline_mode = #tpu.pipeline_mode<synchronous>, transform_indices = @transform_1, window_bounds = array<i64: 8, 512>}, {pipeline_mode = #tpu.pipeline_mode<synchronous>, transform_indices = @transform_2, window_bounds = array<i64: 1, 512>}, {pipeline_mode = #tpu.pipeline_mode<synchronous>, transform_indices = @transform_3, window_bounds = array<i64: 512, 256>}, {pipeline_mode = #tpu.pipeline_mode<synchronous>, transform_indices = @transform_4, window_bounds = array<i64: 1, 256>}, {pipeline_mode = #tpu.pipeline_mode<synchronous>, transform_indices = @transform_5, window_bounds = array<i64: 256, 128>}, {pipeline_mode = #tpu.pipeline_mode<synchronous>, transform_indices = @transform_6, window_bounds = array<i64: 1, 128>}, {transform_indices = @transform_7, window_bounds = array<i64: 8, 128>}]} {
    %c0_i32 = arith.constant 0 : i32
    %0 = arith.cmpi eq, %arg1, %c0_i32 : i32
    %1 = arith.extui %0 : i1 to i32
    %c0_i32_0 = arith.constant 0 : i32
    %2 = arith.cmpi ne, %1, %c0_i32_0 : i32
    scf.if %2 {
      %cst_9 = arith.constant 0.000000e+00 : f32
      %11 = vector.broadcast %cst_9 : f32 to vector<8x8xf32>
      %c0_10 = arith.constant 0 : index
      %c0_11 = arith.constant 0 : index
      %12 = vector.load %arg10[%c0_10, %c0_11] : memref<8x8xf32, #tpu.memory_space<vmem>>, vector<8x8xf32>
      tpu.vector_store %arg10[%c0_10, %c0_11], %11 {strides = array<i32>} : memref<8x8xf32, #tpu.memory_space<vmem>>, vector<8x8xf32>,
    } else {
    }
    %c0 = arith.constant 0 : index
    %c0_1 = arith.constant 0 : index
    %3 = vector.load %arg10[%c0, %c0_1] : memref<8x8xf32, #tpu.memory_space<vmem>>, vector<8x8xf32>
    %c0_2 = arith.constant 0 : index
    %c0_3 = arith.constant 0 : index
    %c0_4 = arith.constant 0 : index
    %4 = vector.load %arg2[%c0_2, %c0_3, %c0_4] : memref<8x8x256xf32, #tpu.memory_space<vmem>>, vector<8x8x256xf32>
    %cst = arith.constant dense<0.000000e+00> : vector<8x8xf32>
    %5 = vector.multi_reduction <add>, %4, %cst [2] : vector<8x8x256xf32> to vector<8x8xf32>
    %6 = arith.addf %3, %5 : vector<8x8xf32>
    %c0_5 = arith.constant 0 : index
    %c0_6 = arith.constant 0 : index
    %7 = vector.load %arg10[%c0_5, %c0_6] : memref<8x8xf32, #tpu.memory_space<vmem>>, vector<8x8xf32>
    tpu.vector_store %arg10[%c0_5, %c0_6], %6 {strides = array<i32>} : memref<8x8xf32, #tpu.memory_space<vmem>>, vector<8x8xf32>,
    %c0_i32_7 = arith.constant 0 : i32
    %8 = arith.cmpi eq, %arg1, %c0_i32_7 : i32
    %9 = arith.extui %8 : i1 to i32
    %c0_i32_8 = arith.constant 0 : i32
    %10 = arith.cmpi ne, %9, %c0_i32_8 : i32
    scf.if %10 {
      %c0_9 = arith.constant 0 : index
      %c0_10 = arith.constant 0 : index
      %11 = vector.load %arg10[%c0_9, %c0_10] : memref<8x8xf32, #tpu.memory_space<vmem>>, vector<8x8xf32>
      %12 = arith.truncf %11 : vector<8x8xf32> to vector<8x8xbf16>
      %c0_11 = arith.constant 0 : index
      %c0_12 = arith.constant 0 : index
      %13 = vector.load %arg3[%c0_11, %c0_12] : memref<8x512xbf16, #tpu.memory_space<vmem>>, vector<8x512xbf16>
      %cst_13 = arith.constant dense<0.000000e+00> : vector<8x512xf32>
      %14 = tpu.matmul %12, %13, %cst_13 {dimension_numbers = #tpu.dot_dimension_numbers<[1], [0], [0], [1], [0, 0, 1, 1], [], []>} : vector<8x8xbf16>, vector<8x512xbf16>, vector<8x512xf32> -> vector<8x512xf32>
      %c0_14 = arith.constant 0 : index
      %c0_15 = arith.constant 0 : index
      %15 = vector.load %arg4[%c0_14, %c0_15] : memref<1x512xf32, #tpu.memory_space<vmem>>, vector<1x512xf32>
      %16 = vector.broadcast %15 : vector<1x512xf32> to vector<8x512xf32>
      %17 = arith.addf %14, %16 : vector<8x512xf32>
      %cst_16 = arith.constant 0.000000e+00 : f32
      %18 = vector.broadcast %cst_16 : f32 to vector<8x512xf32>
      %19 = arith.maximumf %17, %18 : vector<8x512xf32>
      %20 = arith.truncf %19 : vector<8x512xf32> to vector<8x512xbf16>
      %c0_17 = arith.constant 0 : index
      %c0_18 = arith.constant 0 : index
      %21 = vector.load %arg5[%c0_17, %c0_18] : memref<512x256xbf16, #tpu.memory_space<vmem>>, vector<512x256xbf16>
      %cst_19 = arith.constant dense<0.000000e+00> : vector<8x256xf32>
      %22 = tpu.matmul %20, %21, %cst_19 {dimension_numbers = #tpu.dot_dimension_numbers<[1], [0], [0], [1], [0, 0, 1, 1], [], []>} : vector<8x512xbf16>, vector<512x256xbf16>, vector<8x256xf32> -> vector<8x256xf32>
      %c0_20 = arith.constant 0 : index
      %c0_21 = arith.constant 0 : index
      %23 = vector.load %arg6[%c0_20, %c0_21] : memref<1x256xf32, #tpu.memory_space<vmem>>, vector<1x256xf32>
      %24 = vector.broadcast %23 : vector<1x256xf32> to vector<8x256xf32>
      %25 = arith.addf %22, %24 : vector<8x256xf32>
      %cst_22 = arith.constant 0.000000e+00 : f32
      %26 = vector.broadcast %cst_22 : f32 to vector<8x256xf32>
      %27 = arith.maximumf %25, %26 : vector<8x256xf32>
      %28 = arith.truncf %27 : vector<8x256xf32> to vector<8x256xbf16>
      %c0_23 = arith.constant 0 : index
      %c0_24 = arith.constant 0 : index
      %29 = vector.load %arg7[%c0_23, %c0_24] : memref<256x128xbf16, #tpu.memory_space<vmem>>, vector<256x128xbf16>
      %cst_25 = arith.constant dense<0.000000e+00> : vector<8x128xf32>
      %30 = tpu.matmul %28, %29, %cst_25 {dimension_numbers = #tpu.dot_dimension_numbers<[1], [0], [0], [1], [0, 0, 1, 1], [], []>} : vector<8x256xbf16>, vector<256x128xbf16>, vector<8x128xf32> -> vector<8x128xf32>
      %c0_26 = arith.constant 0 : index
      %c0_27 = arith.constant 0 : index
      %31 = vector.load %arg8[%c0_26, %c0_27] : memref<1x128xf32, #tpu.memory_space<vmem>>, vector<1x128xf32>
      %32 = vector.broadcast %31 : vector<1x128xf32> to vector<8x128xf32>
      %33 = arith.addf %30, %32 : vector<8x128xf32>
      %c0_28 = arith.constant 0 : index
      %c0_29 = arith.constant 0 : index
      %34 = vector.load %arg9[%c0_28, %c0_29] : memref<8x128xf32, #tpu.memory_space<vmem>>, vector<8x128xf32>
      tpu.vector_store %arg9[%c0_28, %c0_29], %33 {strides = array<i32>} : memref<8x128xf32, #tpu.memory_space<vmem>>, vector<8x128xf32>,
    } else {
    }
    return
  }
  func.func @transform_0(%arg0: i32, %arg1: i32) -> (i32, i32, i32) {
    %c0_i32 = arith.constant 0 : i32
    %c0_i32_0 = arith.constant 0 : i32
    return %arg0, %c0_i32, %arg1 : i32, i32, i32
  }
  func.func @transform_1(%arg0: i32, %arg1: i32) -> (i32, i32) {
    %c0_i32 = arith.constant 0 : i32
    %c0_i32_0 = arith.constant 0 : i32
    %c0_i32_1 = arith.constant 0 : i32
    return %c0_i32, %c0_i32_0 : i32, i32
  }
  func.func @transform_2(%arg0: i32, %arg1: i32) -> (i32, i32) {
    %c0_i32 = arith.constant 0 : i32
    %c0_i32_0 = arith.constant 0 : i32
    %c0_i32_1 = arith.constant 0 : i32
    return %c0_i32, %c0_i32_0 : i32, i32
  }
  func.func @transform_3(%arg0: i32, %arg1: i32) -> (i32, i32) {
    %c0_i32 = arith.constant 0 : i32
    %c0_i32_0 = arith.constant 0 : i32
    %c0_i32_1 = arith.constant 0 : i32
    return %c0_i32, %c0_i32_0 : i32, i32
  }
  func.func @transform_4(%arg0: i32, %arg1: i32) -> (i32, i32) {
    %c0_i32 = arith.constant 0 : i32
    %c0_i32_0 = arith.constant 0 : i32
    %c0_i32_1 = arith.constant 0 : i32
    return %c0_i32, %c0_i32_0 : i32, i32
  }
  func.func @transform_5(%arg0: i32, %arg1: i32) -> (i32, i32) {
    %c0_i32 = arith.constant 0 : i32
    %c0_i32_0 = arith.constant 0 : i32
    %c0_i32_1 = arith.constant 0 : i32
    return %c0_i32, %c0_i32_0 : i32, i32
  }
  func.func @transform_6(%arg0: i32, %arg1: i32) -> (i32, i32) {
    %c0_i32 = arith.constant 0 : i32
    %c0_i32_0 = arith.constant 0 : i32
    %c0_i32_1 = arith.constant 0 : i32
    return %c0_i32, %c0_i32_0 : i32, i32
  }
  func.func @transform_7(%arg0: i32, %arg1: i32) -> (i32, i32) {
    %c0_i32 = arith.constant 0 : i32
    %c0_i32_0 = arith.constant 0 : i32
    return %arg0, %c0_i32 : i32, i32
  }
}

</mosaic_0001>

<llo_original>
// kernel: tpu_custom_call.1
$region0: #{tpu_custom_call.1}
  #allocation0 [shape = 'u32[]', space=smem, size = 0x4, offset = 0x4, fixed_abs, tag = 'smem constant byte address 0x4 - core index']
  #allocation1 [shape = 'u32[72,128]{1,0:T(1,128)}', space=vmem, size = 0x9000, scoped, tag = 'internal scratch']
  #allocation2 [shape = 'f32[8,8]{1,0:T(8,128)}', space=vmem, size = 0x1000, scoped, tag = 'scratch operand']
  %s0 = inlined_call_operand.hbm [shape: f32[8,8,256], index: 0, kind: input, shape index: {}]
  %s1 = inlined_call_operand.hbm [shape: bf16[8,512], index: 1, kind: input, shape index: {}]
  %s2 = inlined_call_operand.hbm [shape: f32[1,512], index: 2, kind: input, shape index: {}]
  %s3 = inlined_call_operand.hbm [shape: bf16[512,256], index: 3, kind: input, shape index: {}]
  %s4 = inlined_call_operand.vmem [shape: f32[1,256], index: 4, kind: input, shape index: {}]
  %s5 = inlined_call_operand.hbm [shape: bf16[256,128], index: 5, kind: input, shape index: {}]
  %s6 = inlined_call_operand.vmem [shape: f32[1,128], index: 6, kind: input, shape index: {}]
  %s7 = inlined_call_operand.hbm [shape: f32[8,128], index: 7, kind: output, shape index: {}]
  %s8 = sld [smem:[#allocation0]]
  $region66: #{tpu_custom_call.1} parent=0
    _
  %s10 = ssub.s32 1, %s8
  %s11 = scalar_select 0, %s10, %s8
  $region1: #{tpu_custom_call.1} parent=0
    #allocation3 [shape = 'u8[65536]{0}', space=vmem, size = 0x10000, scoped, tag = 'input window, operand 0, single buffered']
    #allocation4 [shape = 's32[1]{0}', space=sflag, size = 0x4, scoped, tag = 'scoped memory for tpu_custom_call.1']
    #allocation5 [shape = 's32[1]{0}', space=sflag, size = 0x4, scoped, tag = 'scoped memory for tpu_custom_call.1']
    #allocation6 [shape = 'u8[8192]{0}', space=vmem, size = 0x2000, scoped, tag = 'input window, operand 1, single buffered']
    #allocation7 [shape = 's32[1]{0}', space=sflag, size = 0x4, scoped, tag = 'scoped memory for tpu_custom_call.1']
    #allocation8 [shape = 'u8[2048]{0}', space=vmem, size = 0x800, scoped, tag = 'input window, operand 2, single buffered']
    #allocation9 [shape = 'u8[262144]{0}', space=vmem, size = 0x40000, scoped, tag = 'input window, operand 3, single buffered']
    #allocation10 [shape = 's32[1]{0}', space=sflag, size = 0x4, scoped, tag = 'scoped memory for tpu_custom_call.1']
    #allocation11 [shape = 'u8[65536]{0}', space=vmem, size = 0x10000, scoped, tag = 'input window, operand 5, single buffered']
    #allocation12 [shape = 'u8[4096]{0}', space=vmem, size = 0x1000, scoped, tag = 'output window, operand 0, single buffered']
    %12 = vsyncpa [#allocation4], 0
    %13 = vsyncpa [#allocation7], 0
    %14 = vsyncpa [#allocation10], 0
    %15 = vsyncpa [#allocation5], 0
    // Predicated region
    $region2: #{tpu_custom_call.1} parent=1 // pred_check
      _
    $region3: #{tpu_custom_call.1} parent=1 // pred_check_branch
      %17 = sbr.rel (0) target = $region5
    $region4: #{tpu_custom_call.1} parent=1 // pred_region
      %19 = vsyncadd [#allocation4], 0
      %s20 = sshll.u32 %s0, 4
      %s21 = int_to_ptr.hbm [resolvable:$true] %s20
      %s22 = sshll.u32 [#allocation3], 4
      %s23 = int_to_ptr.vmem [resolvable:$true] %s22
      %28 = dma.hbm_to_vmem [thread:$0]  %s21, 2048, %s23, [#allocation4], 256, 256, 16
    $region5: #{tpu_custom_call.1} parent=1 // pred_fallthru
      _
    // Predicated region
    $region6: #{tpu_custom_call.1} parent=1 // pred_check
      _
    $region7: #{tpu_custom_call.1} parent=1 // pred_check_branch
      %30 = sbr.rel (0) target = $region9
    $region8: #{tpu_custom_call.1} parent=1 // pred_region
      %32 = vsyncadd [#allocation7], 0
      %s34 = sshll.u32 %s1, 4
      %s35 = int_to_ptr.hbm [resolvable:$true] %s34
      %s36 = sshll.u32 [#allocation6], 4
      %s37 = int_to_ptr.vmem [resolvable:$true] %s36
      %39 = dma.hbm_to_vmem [thread:$0]  %s35, 256, %s37, [#allocation7]
    $region9: #{tpu_custom_call.1} parent=1 // pred_fallthru
      _
    // Predicated region
    $region10: #{tpu_custom_call.1} parent=1 // pred_check
      _
    $region11: #{tpu_custom_call.1} parent=1 // pred_check_branch
      %41 = sbr.rel (0) target = $region13
    $region12: #{tpu_custom_call.1} parent=1 // pred_region
      %43 = vsyncadd [#allocation7], 0
      %s45 = sshll.u32 %s2, 4
      %s46 = int_to_ptr.hbm [resolvable:$true] %s45
      %s47 = sshll.u32 [#allocation8], 4
      %s48 = int_to_ptr.vmem [resolvable:$true] %s47
      %50 = dma.hbm_to_vmem [thread:$0]  %s46, 64, %s48, [#allocation7]
    $region13: #{tpu_custom_call.1} parent=1 // pred_fallthru
      _
    // Predicated region
    $region14: #{tpu_custom_call.1} parent=1 // pred_check
      _
    $region15: #{tpu_custom_call.1} parent=1 // pred_check_branch
      %52 = sbr.rel (0) target = $region17
    $region16: #{tpu_custom_call.1} parent=1 // pred_region
      %54 = vsyncadd [#allocation10], 0
      %s55 = sshll.u32 %s3, 4
      %s56 = int_to_ptr.hbm [resolvable:$true] %s55
      %s57 = sshll.u32 [#allocation9], 4
      %s58 = int_to_ptr.vmem [resolvable:$true] %s57
      %63 = dma.hbm_to_vmem [thread:$0]  %s56, 8192, %s58, [#allocation10], 128, 128, 8
    $region17: #{tpu_custom_call.1} parent=1 // pred_fallthru
      _
    // Predicated region
    $region18: #{tpu_custom_call.1} parent=1 // pred_check
      _
    $region19: #{tpu_custom_call.1} parent=1 // pred_check_branch
      %65 = sbr.rel (0) target = $region21
    $region20: #{tpu_custom_call.1} parent=1 // pred_region
      _
    $region21: #{tpu_custom_call.1} parent=1 // pred_fallthru
      _
    // Predicated region
    $region22: #{tpu_custom_call.1} parent=1 // pred_check
      _
    $region23: #{tpu_custom_call.1} parent=1 // pred_check_branch
      %67 = sbr.rel (0) target = $region25
    $region24: #{tpu_custom_call.1} parent=1 // pred_region
      %69 = vsyncadd [#allocation10], 0
      %s70 = sshll.u32 %s5, 4
      %s71 = int_to_ptr.hbm [resolvable:$true] %s70
      %s72 = sshll.u32 [#allocation11], 4
      %s73 = int_to_ptr.vmem [resolvable:$true] %s72
      %78 = dma.hbm_to_vmem [thread:$0]  %s71, 2048, %s73, [#allocation10], 64, 64, 4
    $region25: #{tpu_custom_call.1} parent=1 // pred_fallthru
      _
    // Predicated region
    $region26: #{tpu_custom_call.1} parent=1 // pred_check
      _
    $region27: #{tpu_custom_call.1} parent=1 // pred_check_branch
      %80 = sbr.rel (0) target = $region29
    $region28: #{tpu_custom_call.1} parent=1 // pred_region
      _
    $region29: #{tpu_custom_call.1} parent=1 // pred_fallthru
      _
    // Predicated region
    $region30: #{tpu_custom_call.1} parent=1 // pred_check
      _
    $region31: #{tpu_custom_call.1} parent=1 // pred_check_branch
      %82 = sbr.rel (0) target = $region33
    $region32: #{tpu_custom_call.1} parent=1 // pred_region
      %84 = dma.done [#allocation4], 2048
    $region33: #{tpu_custom_call.1} parent=1 // pred_fallthru
      _
    // Predicated region
    $region34: #{tpu_custom_call.1} parent=1 // pred_check
      _
    $region35: #{tpu_custom_call.1} parent=1 // pred_check_branch
      %86 = sbr.rel (0) target = $region37
    $region36: #{tpu_custom_call.1} parent=1 // pred_region
      %88 = dma.done [#allocation7], 256
    $region37: #{tpu_custom_call.1} parent=1 // pred_fallthru
      _
    // Predicated region
    $region38: #{tpu_custom_call.1} parent=1 // pred_check
      _
    $region39: #{tpu_custom_call.1} parent=1 // pred_check_branch
      %90 = sbr.rel (0) target = $region41
    $region40: #{tpu_custom_call.1} parent=1 // pred_region
      %92 = dma.done [#allocation7], 64
    $region41: #{tpu_custom_call.1} parent=1 // pred_fallthru
      _
    // Predicated region
    $region42: #{tpu_custom_call.1} parent=1 // pred_check
      _
    $region43: #{tpu_custom_call.1} parent=1 // pred_check_branch
      %94 = sbr.rel (0) target = $region45
    $region44: #{tpu_custom_call.1} parent=1 // pred_region
      %96 = dma.done [#allocation10], 8192
    $region45: #{tpu_custom_call.1} parent=1 // pred_fallthru
      _
    // Predicated region
    $region46: #{tpu_custom_call.1} parent=1 // pred_check
      _
    $region47: #{tpu_custom_call.1} parent=1 // pred_check_branch
      %98 = sbr.rel (0) target = $region49
    $region48: #{tpu_custom_call.1} parent=1 // pred_region
      %100 = dma.done [#allocation10], 2048
    $region49: #{tpu_custom_call.1} parent=1 // pred_fallthru
      _
    %p102 = scmp.eq.s32.totalorder 0, 0
    // Predicated region
    $region50: #{tpu_custom_call.1} parent=1 // pred_check
      %p103 = pneg %p102
    $region51: #{tpu_custom_call.1} parent=1 // pred_check_branch
      %105 = sbr.rel (%p103) target = $region53
    $region52: #{tpu_custom_call.1} parent=1 // pred_region
      %vm106 = vcmask 64512
      %107 = vst.msk [vmem:[#allocation2] sm:$0xff] %vm106, 0.0
    $region53: #{tpu_custom_call.1} parent=1 // pred_fallthru
      _
    %v108 = vld [vmem:[#allocation2] sm:$0xff]
    %v109 = vld [vmem:[#allocation3] sm:$0xff]
    %v110 = vld [vmem:[#allocation3 + $0x8] sm:$0xff]
    %v111 = vld [vmem:[#allocation3 + $0x10] sm:$0xff]
    %v112 = vld [vmem:[#allocation3 + $0x18] sm:$0xff]
    %v113 = vld [vmem:[#allocation3 + $0x20] sm:$0xff]
    %v114 = vld [vmem:[#allocation3 + $0x28] sm:$0xff]
    %v115 = vld [vmem:[#allocation3 + $0x30] sm:$0xff]
    %v116 = vld [vmem:[#allocation3 + $0x38] sm:$0xff]
    %v117 = vld [vmem:[#allocation3 + $0x40] sm:$0xff]
    %v118 = vld [vmem:[#allocation3 + $0x48] sm:$0xff]
    %v119 = vld [vmem:[#allocation3 + $0x50] sm:$0xff]
    %v120 = vld [vmem:[#allocation3 + $0x58] sm:$0xff]
    %v121 = vld [vmem:[#allocation3 + $0x60] sm:$0xff]
    %v122 = vld [vmem:[#allocation3 + $0x68] sm:$0xff]
    %v123 = vld [vmem:[#allocation3 + $0x70] sm:$0xff]
    %v124 = vld [vmem:[#allocation3 + $0x78] sm:$0xff]
    %v125 = vadd.f32 %v109, %v110
    %126 = vadd.xlane.f32.xlu0 %v125
    %v127 = vpop.xlane.xlu0 %126
    %v128 = vadd.f32 %v111, %v112
    %129 = vadd.xlane.f32.xlu0 %v128
    %v130 = vpop.xlane.xlu0 %129
    %v131 = vadd.f32 %v113, %v114
    %132 = vadd.xlane.f32.xlu0 %v131
    %v133 = vpop.xlane.xlu0 %132
    %v134 = vadd.f32 %v115, %v116
    %135 = vadd.xlane.f32.xlu0 %v134
    %v136 = vpop.xlane.xlu0 %135
    %v137 = vadd.f32 %v117, %v118
    %138 = vadd.xlane.f32.xlu0 %v137
    %v139 = vpop.xlane.xlu0 %138
    %v140 = vadd.f32 %v119, %v120
    %141 = vadd.xlane.f32.xlu0 %v140
    %v142 = vpop.xlane.xlu0 %141
    %v143 = vadd.f32 %v121, %v122
    %144 = vadd.xlane.f32.xlu0 %v143
    %v145 = vpop.xlane.xlu0 %144
    %v146 = vadd.f32 %v123, %v124
    %147 = vadd.xlane.f32.xlu0 %v146
    %v148 = vpop.xlane.xlu0 %147
    %v157 = vlaneseq
    %v158 = vand.u32 %v157, 127
    %v159 = vperm.slane %v127, %v158
    %v160 = vperm.slane %v130, %v158
    %v161 = vperm.slane %v133, %v158
    %v162 = vperm.slane %v136, %v158
    %v163 = vperm.slane %v139, %v158
    %v164 = vperm.slane %v142, %v158
    %v165 = vperm.slane %v145, %v158
    %v166 = vperm.slane %v148, %v158
    %vm167 = vcmask 1041409
    %v168 = vsel %vm167, %v160, %v159
    %vm169 = vcmask 1042434
    %v170 = vsel %vm169, %v161, %v168
    %vm171 = vcmask 1043459
    %v172 = vsel %vm171, %v162, %v170
    %vm173 = vcmask 1044484
    %v174 = vsel %vm173, %v163, %v172
    %vm175 = vcmask 1045509
    %v176 = vsel %vm175, %v164, %v174
    %vm177 = vcmask 1046534
    %v178 = vsel %vm177, %v165, %v176
    %vm179 = vcmask 1047559
    %v180 = vsel %vm179, %v166, %v178
    %v182 = vadd.f32 %v108, %v180
    %vm183 = vcmask 64512
    %184 = vst.msk [vmem:[#allocation2] sm:$0xff] %vm183, %v182
    // Predicated region
    $region54: #{tpu_custom_call.1} parent=1 // pred_check
      %p185 = pneg %p102
    $region55: #{tpu_custom_call.1} parent=1 // pred_check_branch
      %187 = sbr.rel (%p185) target = $region57
    $region56: #{tpu_custom_call.1} parent=1 // pred_region
      %v188 = vld [vmem:[#allocation2] sm:$0xff]
      %v189 = vpack.c.bf16 %v188, %v188
      %v190 = vld [vmem:[#allocation6] sm:$0xff]
      %v191 = vld [vmem:[#allocation6 + $0x8] sm:$0xff]
      %v192 = vld [vmem:[#allocation8] sm:$0xf]
      %v194 = vperm.slane %v192, 0
      %v195 = vperm.slane %v192, 1
      %v196 = vperm.slane %v192, 2
      %v197 = vperm.slane %v192, 3
      %v204 = vunpack.c.l.b16 %v190
      %v205 = vunpack.c.h.b16 %v190
      %v206 = vunpack.c.l.b16 %v191
      %v207 = vunpack.c.h.b16 %v191
      %v208 = vpack.c.b16 %v204, %v204
      %v209 = vpack.c.b16 %v205, %v205
      %v210 = vpack.c.b16 %v206, %v206
      %v211 = vpack.c.b16 %v207, %v207
      %v213 = vsel %vm183, %v189, 0
      %vm215 = vcmask 1043456
      %v217 = vsel %vm215, %v208, 0
      %v220 = vsel %vm215, %v209, 0
      %v223 = vsel %vm215, %v210, 0
      %v226 = vsel %vm215, %v211, 0
      %228 = vmatpush.bf16.msra.mxu0 0
      %229 = vmatpush.bf16.msra.mxu0 0
      %230 = vmatpush.bf16.msra.mxu0 0
      %231 = vmatpush.bf16.msra.mxu0 0
      %232 = vmatpush.bf16.msra.mxu0 0
      %233 = vmatpush.bf16.msra.mxu0 0
      %234 = vmatpush.bf16.msra.mxu0 0
      %235 = vmatpush.bf16.msra.mxu0 %v217
      %236 = vmatmul.bf16.gmra.mxu0 %v213
      %v237 = vpop.f32.mrf.mxu0
      %v238 = vadd.f32 %v194, %v237
      %v239 = vpop.f32.mrf.mxu0
      %240 = vdwg.mxu0
      %241 = vmatpush.bf16.msra.mxu0 0
      %242 = vmatpush.bf16.msra.mxu0 0
      %243 = vmatpush.bf16.msra.mxu0 0
      %244 = vmatpush.bf16.msra.mxu0 0
      %245 = vmatpush.bf16.msra.mxu0 0
      %246 = vmatpush.bf16.msra.mxu0 0
      %247 = vmatpush.bf16.msra.mxu0 0
      %248 = vmatpush.bf16.msra.mxu0 %v220
      %249 = vmatmul.bf16.gmra.mxu0 %v213
      %v250 = vpop.f32.mrf.mxu0
      %v251 = vadd.f32 %v195, %v250
      %v252 = vpop.f32.mrf.mxu0
      %253 = vdwg.mxu0
      %254 = vmatpush.bf16.msra.mxu0 0
      %255 = vmatpush.bf16.msra.mxu0 0
      %256 = vmatpush.bf16.msra.mxu0 0
      %257 = vmatpush.bf16.msra.mxu0 0
      %258 = vmatpush.bf16.msra.mxu0 0
      %259 = vmatpush.bf16.msra.mxu0 0
      %260 = vmatpush.bf16.msra.mxu0 0
      %261 = vmatpush.bf16.msra.mxu0 %v223
      %262 = vmatmul.bf16.gmra.mxu0 %v213
      %v263 = vpop.f32.mrf.mxu0
      %v264 = vadd.f32 %v196, %v263
      %v265 = vpop.f32.mrf.mxu0
      %266 = vdwg.mxu0
      %267 = vmatpush.bf16.msra.mxu0 0
      %268 = vmatpush.bf16.msra.mxu0 0
      %269 = vmatpush.bf16.msra.mxu0 0
      %270 = vmatpush.bf16.msra.mxu0 0
      %271 = vmatpush.bf16.msra.mxu0 0
      %272 = vmatpush.bf16.msra.mxu0 0
      %273 = vmatpush.bf16.msra.mxu0 0
      %274 = vmatpush.bf16.msra.mxu0 %v226
      %275 = vmatmul.bf16.gmra.mxu0 %v213
      %v276 = vpop.f32.mrf.mxu0
      %v277 = vadd.f32 %v197, %v276
      %v278 = vpop.f32.mrf.mxu0
      %279 = vdwg.mxu0
      %v280 = vmax.f32 %v238, 0.0
      %v281 = vmax.f32 %v251, 0.0
      %v282 = vmax.f32 %v264, 0.0
      %v283 = vmax.f32 %v277, 0.0
      %v284 = vpack.c.bf16 %v280, %v280
      %v285 = vpack.c.bf16 %v281, %v281
      %v286 = vpack.c.bf16 %v282, %v282
      %v287 = vpack.c.bf16 %v283, %v283
      %v288 = vld [vmem:[#allocation9] sm:$0xff]
      %v289 = vld [vmem:[#allocation9 + $0x8] sm:$0xff]
      %v290 = vld [vmem:[#allocation9 + $0x10] sm:$0xff]
      %v291 = vld [vmem:[#allocation9 + $0x18] sm:$0xff]
      %v292 = vld [vmem:[#allocation9 + $0x20] sm:$0xff]
      %v293 = vld [vmem:[#allocation9 + $0x28] sm:$0xff]
      %v294 = vld [vmem:[#allocation9 + $0x30] sm:$0xff]
      %v295 = vld [vmem:[#allocation9 + $0x38] sm:$0xff]
      %v296 = vld [vmem:[#allocation9 + $0x40] sm:$0xff]
      %v297 = vld [vmem:[#allocation9 + $0x48] sm:$0xff]
      %v298 = vld [vmem:[#allocation9 + $0x50] sm:$0xff]
      %v299 = vld [vmem:[#allocation9 + $0x58] sm:$0xff]
      %v300 = vld [vmem:[#allocation9 + $0x60] sm:$0xff]
      %v301 = vld [vmem:[#allocation9 + $0x68] sm:$0xff]
      %v302 = vld [vmem:[#allocation9 + $0x70] sm:$0xff]
      %v303 = vld [vmem:[#allocation9 + $0x78] sm:$0xff]
      %v304 = vld [vmem:[#allocation9 + $0x80] sm:$0xff]
      %v305 = vld [vmem:[#allocation9 + $0x88] sm:$0xff]
      %v306 = vld [vmem:[#allocation9 + $0x90] sm:$0xff]
      %v307 = vld [vmem:[#allocation9 + $0x98] sm:$0xff]
      %v308 = vld [vmem:[#allocation9 + $0xa0] sm:$0xff]
      %v309 = vld [vmem:[#allocation9 + $0xa8] sm:$0xff]
      %v310 = vld [vmem:[#allocation9 + $0xb0] sm:$0xff]
      %v311 = vld [vmem:[#allocation9 + $0xb8] sm:$0xff]
      %v312 = vld [vmem:[#allocation9 + $0xc0] sm:$0xff]
      %v313 = vld [vmem:[#allocation9 + $0xc8] sm:$0xff]
      %v314 = vld [vmem:[#allocation9 + $0xd0] sm:$0xff]
      %v315 = vld [vmem:[#allocation9 + $0xd8] sm:$0xff]
      %v316 = vld [vmem:[#allocation9 + $0xe0] sm:$0xff]
      %v317 = vld [vmem:[#allocation9 + $0xe8] sm:$0xff]
      %v318 = vld [vmem:[#allocation9 + $0xf0] sm:$0xff]
      %v319 = vld [vmem:[#allocation9 + $0xf8] sm:$0xff]
      %v320 = vld [vmem:[#allocation9 + $0x100] sm:$0xff]
      %v321 = vld [vmem:[#allocation9 + $0x108] sm:$0xff]
      %v322 = vld [vmem:[#allocation9 + $0x110] sm:$0xff]
      %v323 = vld [vmem:[#allocation9 + $0x118] sm:$0xff]
      %v324 = vld [vmem:[#allocation9 + $0x120] sm:$0xff]
      %v325 = vld [vmem:[#allocation9 + $0x128] sm:$0xff]
      %v326 = vld [vmem:[#allocation9 + $0x130] sm:$0xff]
      %v327 = vld [vmem:[#allocation9 + $0x138] sm:$0xff]
      %v328 = vld [vmem:[#allocation9 + $0x140] sm:$0xff]
      %v329 = vld [vmem:[#allocation9 + $0x148] sm:$0xff]
      %v330 = vld [vmem:[#allocation9 + $0x150] sm:$0xff]
      %v331 = vld [vmem:[#allocation9 + $0x158] sm:$0xff]
      %v332 = vld [vmem:[#allocation9 + $0x160] sm:$0xff]
      %v333 = vld [vmem:[#allocation9 + $0x168] sm:$0xff]
      %v334 = vld [vmem:[#allocation9 + $0x170] sm:$0xff]
      %v335 = vld [vmem:[#allocation9 + $0x178] sm:$0xff]
      %v336 = vld [vmem:[#allocation9 + $0x180] sm:$0xff]
      %v337 = vld [vmem:[#allocation9 + $0x188] sm:$0xff]
      %v338 = vld [vmem:[#allocation9 + $0x190] sm:$0xff]
      %v339 = vld [vmem:[#allocation9 + $0x198] sm:$0xff]
      %v340 = vld [vmem:[#allocation9 + $0x1a0] sm:$0xff]
      %v341 = vld [vmem:[#allocation9 + $0x1a8] sm:$0xff]
      %v342 = vld [vmem:[#allocation9 + $0x1b0] sm:$0xff]
      %v343 = vld [vmem:[#allocation9 + $0x1b8] sm:$0xff]
      %v344 = vld [vmem:[#allocation9 + $0x1c0] sm:$0xff]
      %v345 = vld [vmem:[#allocation9 + $0x1c8] sm:$0xff]
      %v346 = vld [vmem:[#allocation9 + $0x1d0] sm:$0xff]
      %v347 = vld [vmem:[#allocation9 + $0x1d8] sm:$0xff]
      %v348 = vld [vmem:[#allocation9 + $0x1e0] sm:$0xff]
      %v349 = vld [vmem:[#allocation9 + $0x1e8] sm:$0xff]
      %v350 = vld [vmem:[#allocation9 + $0x1f0] sm:$0xff]
      %v351 = vld [vmem:[#allocation9 + $0x1f8] sm:$0xff]
      %v352 = vld [vmem:[%s4] sm:$0x3]
      %v354 = vperm.slane %v352, 0
      %v355 = vperm.slane %v352, 1
      %v422 = vunpack.c.l.b16 %v288
      %v423 = vunpack.c.h.b16 %v288
      %v424 = vunpack.c.l.b16 %v289
      %v425 = vunpack.c.h.b16 %v289
      %v426 = vunpack.c.l.b16 %v290
      %v427 = vunpack.c.h.b16 %v290
      %v428 = vunpack.c.l.b16 %v291
      %v429 = vunpack.c.h.b16 %v291
      %v430 = vunpack.c.l.b16 %v292
      %v431 = vunpack.c.h.b16 %v292
      %v432 = vunpack.c.l.b16 %v293
      %v433 = vunpack.c.h.b16 %v293
      %v434 = vunpack.c.l.b16 %v294
      %v435 = vunpack.c.h.b16 %v294
      %v436 = vunpack.c.l.b16 %v295
      %v437 = vunpack.c.h.b16 %v295
      %v438 = vunpack.c.l.b16 %v296
      %v439 = vunpack.c.h.b16 %v296
      %v440 = vunpack.c.l.b16 %v297
      %v441 = vunpack.c.h.b16 %v297
      %v442 = vunpack.c.l.b16 %v298
      %v443 = vunpack.c.h.b16 %v298
      %v444 = vunpack.c.l.b16 %v299
      %v445 = vunpack.c.h.b16 %v299
      %v446 = vunpack.c.l.b16 %v300
      %v447 = vunpack.c.h.b16 %v300
      %v448 = vunpack.c.l.b16 %v301
      %v449 = vunpack.c.h.b16 %v301
      %v450 = vunpack.c.l.b16 %v302
      %v451 = vunpack.c.h.b16 %v302
      %v452 = vunpack.c.l.b16 %v303
      %v453 = vunpack.c.h.b16 %v303
      %v454 = vunpack.c.l.b16 %v304
      %v455 = vunpack.c.h.b16 %v304
      %v456 = vunpack.c.l.b16 %v305
      %v457 = vunpack.c.h.b16 %v305
      %v458 = vunpack.c.l.b16 %v306
      %v459 = vunpack.c.h.b16 %v306
      %v460 = vunpack.c.l.b16 %v307
      %v461 = vunpack.c.h.b16 %v307
      %v462 = vunpack.c.l.b16 %v308
      %v463 = vunpack.c.h.b16 %v308
      %v464 = vunpack.c.l.b16 %v309
      %v465 = vunpack.c.h.b16 %v309
      %v466 = vunpack.c.l.b16 %v310
      %v467 = vunpack.c.h.b16 %v310
      %v468 = vunpack.c.l.b16 %v311
      %v469 = vunpack.c.h.b16 %v311
      %v470 = vunpack.c.l.b16 %v312
      %v471 = vunpack.c.h.b16 %v312
      %v472 = vunpack.c.l.b16 %v313
      %v473 = vunpack.c.h.b16 %v313
      %v474 = vunpack.c.l.b16 %v314
      %v475 = vunpack.c.h.b16 %v314
      %v476 = vunpack.c.l.b16 %v315
      %v477 = vunpack.c.h.b16 %v315
      %v478 = vunpack.c.l.b16 %v316
      %v479 = vunpack.c.h.b16 %v316
      %v480 = vunpack.c.l.b16 %v317
      %v481 = vunpack.c.h.b16 %v317
      %v482 = vunpack.c.l.b16 %v318
      %v483 = vunpack.c.h.b16 %v318
      %v484 = vunpack.c.l.b16 %v319
      %v485 = vunpack.c.h.b16 %v319
      %v486 = vunpack.c.l.b16 %v320
      %v487 = vunpack.c.h.b16 %v320
      %v488 = vunpack.c.l.b16 %v321
      %v489 = vunpack.c.h.b16 %v321
      %v490 = vunpack.c.l.b16 %v322
      %v491 = vunpack.c.h.b16 %v322
      %v492 = vunpack.c.l.b16 %v323
      %v493 = vunpack.c.h.b16 %v323
      %v494 = vunpack.c.l.b16 %v324
      %v495 = vunpack.c.h.b16 %v324
      %v496 = vunpack.c.l.b16 %v325
      %v497 = vunpack.c.h.b16 %v325
      %v498 = vunpack.c.l.b16 %v326
      %v499 = vunpack.c.h.b16 %v326
      %v500 = vunpack.c.l.b16 %v327
      %v501 = vunpack.c.h.b16 %v327
      %v502 = vunpack.c.l.b16 %v328
      %v503 = vunpack.c.h.b16 %v328
      %v504 = vunpack.c.l.b16 %v329
      %v505 = vunpack.c.h.b16 %v329
      %v506 = vunpack.c.l.b16 %v330
      %v507 = vunpack.c.h.b16 %v330
      %v508 = vunpack.c.l.b16 %v331
      %v509 = vunpack.c.h.b16 %v331
      %v510 = vunpack.c.l.b16 %v332
      %v511 = vunpack.c.h.b16 %v332
      %v512 = vunpack.c.l.b16 %v333
      %v513 = vunpack.c.h.b16 %v333
      %v514 = vunpack.c.l.b16 %v334
      %v515 = vunpack.c.h.b16 %v334
      %v516 = vunpack.c.l.b16 %v335
      %v517 = vunpack.c.h.b16 %v335
      %v518 = vunpack.c.l.b16 %v336
      %v519 = vunpack.c.h.b16 %v336
      %v520 = vunpack.c.l.b16 %v337
      %v521 = vunpack.c.h.b16 %v337
      %v522 = vunpack.c.l.b16 %v338
      %v523 = vunpack.c.h.b16 %v338
      %v524 = vunpack.c.l.b16 %v339
      %v525 = vunpack.c.h.b16 %v339
      %v526 = vunpack.c.l.b16 %v340
      %v527 = vunpack.c.h.b16 %v340
      %v528 = vunpack.c.l.b16 %v341
      %v529 = vunpack.c.h.b16 %v341
      %v530 = vunpack.c.l.b16 %v342
      %v531 = vunpack.c.h.b16 %v342
      %v532 = vunpack.c.l.b16 %v343
      %v533 = vunpack.c.h.b16 %v343
      %v534 = vunpack.c.l.b16 %v344
      %v535 = vunpack.c.h.b16 %v344
      %v536 = vunpack.c.l.b16 %v345
      %v537 = vunpack.c.h.b16 %v345
      %v538 = vunpack.c.l.b16 %v346
      %v539 = vunpack.c.h.b16 %v346
      %v540 = vunpack.c.l.b16 %v347
      %v541 = vunpack.c.h.b16 %v347
      %v542 = vunpack.c.l.b16 %v348
      %v543 = vunpack.c.h.b16 %v348
      %v544 = vunpack.c.l.b16 %v349
      %v545 = vunpack.c.h.b16 %v349
      %v546 = vunpack.c.l.b16 %v350
      %v547 = vunpack.c.h.b16 %v350
      %v548 = vunpack.c.l.b16 %v351
      %v549 = vunpack.c.h.b16 %v351
      %v550 = vpack.c.b16 %v424, %v422
      %v551 = vpack.c.b16 %v425, %v423
      %v552 = vpack.c.b16 %v428, %v426
      %v553 = vpack.c.b16 %v429, %v427
      %v554 = vpack.c.b16 %v432, %v430
      %v555 = vpack.c.b16 %v433, %v431
      %v556 = vpack.c.b16 %v436, %v434
      %v557 = vpack.c.b16 %v437, %v435
      %v558 = vpack.c.b16 %v440, %v438
      %v559 = vpack.c.b16 %v441, %v439
      %v560 = vpack.c.b16 %v444, %v442
      %v561 = vpack.c.b16 %v445, %v443
      %v562 = vpack.c.b16 %v448, %v446
      %v563 = vpack.c.b16 %v449, %v447
      %v564 = vpack.c.b16 %v452, %v450
      %v565 = vpack.c.b16 %v453, %v451
      %v566 = vpack.c.b16 %v456, %v454
      %v567 = vpack.c.b16 %v457, %v455
      %v568 = vpack.c.b16 %v460, %v458
      %v569 = vpack.c.b16 %v461, %v459
      %v570 = vpack.c.b16 %v464, %v462
      %v571 = vpack.c.b16 %v465, %v463
      %v572 = vpack.c.b16 %v468, %v466
      %v573 = vpack.c.b16 %v469, %v467
      %v574 = vpack.c.b16 %v472, %v470
      %v575 = vpack.c.b16 %v473, %v471
      %v576 = vpack.c.b16 %v476, %v474
      %v577 = vpack.c.b16 %v477, %v475
      %v578 = vpack.c.b16 %v480, %v478
      %v579 = vpack.c.b16 %v481, %v479
      %v580 = vpack.c.b16 %v484, %v482
      %v581 = vpack.c.b16 %v485, %v483
      %v582 = vpack.c.b16 %v488, %v486
      %v583 = vpack.c.b16 %v489, %v487
      %v584 = vpack.c.b16 %v492, %v490
      %v585 = vpack.c.b16 %v493, %v491
      %v586 = vpack.c.b16 %v496, %v494
      %v587 = vpack.c.b16 %v497, %v495
      %v588 = vpack.c.b16 %v500, %v498
      %v589 = vpack.c.b16 %v501, %v499
      %v590 = vpack.c.b16 %v504, %v502
      %v591 = vpack.c.b16 %v505, %v503
      %v592 = vpack.c.b16 %v508, %v506
      %v593 = vpack.c.b16 %v509, %v507
      %v594 = vpack.c.b16 %v512, %v510
      %v595 = vpack.c.b16 %v513, %v511
      %v596 = vpack.c.b16 %v516, %v514
      %v597 = vpack.c.b16 %v517, %v515
      %v598 = vpack.c.b16 %v520, %v518
      %v599 = vpack.c.b16 %v521, %v519
      %v600 = vpack.c.b16 %v524, %v522
      %v601 = vpack.c.b16 %v525, %v523
      %v602 = vpack.c.b16 %v528, %v526
      %v603 = vpack.c.b16 %v529, %v527
      %v604 = vpack.c.b16 %v532, %v530
      %v605 = vpack.c.b16 %v533, %v531
      %v606 = vpack.c.b16 %v536, %v534
      %v607 = vpack.c.b16 %v537, %v535
      %v608 = vpack.c.b16 %v540, %v538
      %v609 = vpack.c.b16 %v541, %v539
      %v610 = vpack.c.b16 %v544, %v542
      %v611 = vpack.c.b16 %v545, %v543
      %v612 = vpack.c.b16 %v548, %v546
      %v613 = vpack.c.b16 %v549, %v547
      %678 = vmatpush.bf16.msra.mxu0 %v564
      %679 = vmatpush.bf16.msra.mxu0 %v562
      %680 = vmatpush.bf16.msra.mxu0 %v560
      %681 = vmatpush.bf16.msra.mxu0 %v558
      %682 = vmatpush.bf16.msra.mxu0 %v556
      %683 = vmatpush.bf16.msra.mxu0 %v554
      %684 = vmatpush.bf16.msra.mxu0 %v552
      %685 = vmatpush.bf16.msra.mxu0 %v550
      %686 = vmatmul.bf16.gmra.mxu0 %v284
      %v687 = vpop.f32.mrf.mxu0
      %v688 = vadd.f32 %v354, %v687
      %v689 = vpop.f32.mrf.mxu0
      %690 = vdwg.mxu0
      %691 = vmatpush.bf16.msra.mxu0 %v580
      %692 = vmatpush.bf16.msra.mxu0 %v578
      %693 = vmatpush.bf16.msra.mxu0 %v576
      %694 = vmatpush.bf16.msra.mxu0 %v574
      %695 = vmatpush.bf16.msra.mxu0 %v572
      %696 = vmatpush.bf16.msra.mxu0 %v570
      %697 = vmatpush.bf16.msra.mxu0 %v568
      %698 = vmatpush.bf16.msra.mxu0 %v566
      %699 = vmatmul.bf16.gmra.mxu0 %v285
      %v700 = vpop.f32.mrf.mxu0
      %v701 = vadd.f32 %v688, %v700
      %v702 = vpop.f32.mrf.mxu0
      %703 = vdwg.mxu0
      %704 = vmatpush.bf16.msra.mxu0 %v596
      %705 = vmatpush.bf16.msra.mxu0 %v594
      %706 = vmatpush.bf16.msra.mxu0 %v592
      %707 = vmatpush.bf16.msra.mxu0 %v590
      %708 = vmatpush.bf16.msra.mxu0 %v588
      %709 = vmatpush.bf16.msra.mxu0 %v586
      %710 = vmatpush.bf16.msra.mxu0 %v584
      %711 = vmatpush.bf16.msra.mxu0 %v582
      %712 = vmatmul.bf16.gmra.mxu0 %v286
      %v713 = vpop.f32.mrf.mxu0
      %v714 = vadd.f32 %v701, %v713
      %v715 = vpop.f32.mrf.mxu0
      %716 = vdwg.mxu0
      %717 = vmatpush.bf16.msra.mxu0 %v612
      %718 = vmatpush.bf16.msra.mxu0 %v610
      %719 = vmatpush.bf16.msra.mxu0 %v608
      %720 = vmatpush.bf16.msra.mxu0 %v606
      %721 = vmatpush.bf16.msra.mxu0 %v604
      %722 = vmatpush.bf16.msra.mxu0 %v602
      %723 = vmatpush.bf16.msra.mxu0 %v600
      %724 = vmatpush.bf16.msra.mxu0 %v598
      %725 = vmatmul.bf16.gmra.mxu0 %v287
      %v726 = vpop.f32.mrf.mxu0
      %v727 = vadd.f32 %v714, %v726
      %v728 = vpop.f32.mrf.mxu0
      %729 = vdwg.mxu0
      %730 = vmatpush.bf16.msra.mxu0 %v565
      %731 = vmatpush.bf16.msra.mxu0 %v563
      %732 = vmatpush.bf16.msra.mxu0 %v561
      %733 = vmatpush.bf16.msra.mxu0 %v559
      %734 = vmatpush.bf16.msra.mxu0 %v557
      %735 = vmatpush.bf16.msra.mxu0 %v555
      %736 = vmatpush.bf16.msra.mxu0 %v553
      %737 = vmatpush.bf16.msra.mxu0 %v551
      %738 = vmatmul.bf16.gmra.mxu0 %v284
      %v739 = vpop.f32.mrf.mxu0
      %v740 = vadd.f32 %v355, %v739
      %v741 = vpop.f32.mrf.mxu0
      %742 = vdwg.mxu0
      %743 = vmatpush.bf16.msra.mxu0 %v581
      %744 = vmatpush.bf16.msra.mxu0 %v579
      %745 = vmatpush.bf16.msra.mxu0 %v577
      %746 = vmatpush.bf16.msra.mxu0 %v575
      %747 = vmatpush.bf16.msra.mxu0 %v573
      %748 = vmatpush.bf16.msra.mxu0 %v571
      %749 = vmatpush.bf16.msra.mxu0 %v569
      %750 = vmatpush.bf16.msra.mxu0 %v567
      %751 = vmatmul.bf16.gmra.mxu0 %v285
      %v752 = vpop.f32.mrf.mxu0
      %v753 = vadd.f32 %v740, %v752
      %v754 = vpop.f32.mrf.mxu0
      %755 = vdwg.mxu0
      %756 = vmatpush.bf16.msra.mxu0 %v597
      %757 = vmatpush.bf16.msra.mxu0 %v595
      %758 = vmatpush.bf16.msra.mxu0 %v593
      %759 = vmatpush.bf16.msra.mxu0 %v591
      %760 = vmatpush.bf16.msra.mxu0 %v589
      %761 = vmatpush.bf16.msra.mxu0 %v587
      %762 = vmatpush.bf16.msra.mxu0 %v585
      %763 = vmatpush.bf16.msra.mxu0 %v583
      %764 = vmatmul.bf16.gmra.mxu0 %v286
      %v765 = vpop.f32.mrf.mxu0
      %v766 = vadd.f32 %v753, %v765
      %v767 = vpop.f32.mrf.mxu0
      %768 = vdwg.mxu0
      %769 = vmatpush.bf16.msra.mxu0 %v613
      %770 = vmatpush.bf16.msra.mxu0 %v611
      %771 = vmatpush.bf16.msra.mxu0 %v609
      %772 = vmatpush.bf16.msra.mxu0 %v607
      %773 = vmatpush.bf16.msra.mxu0 %v605
      %774 = vmatpush.bf16.msra.mxu0 %v603
      %775 = vmatpush.bf16.msra.mxu0 %v601
      %776 = vmatpush.bf16.msra.mxu0 %v599
      %777 = vmatmul.bf16.gmra.mxu0 %v287
      %v778 = vpop.f32.mrf.mxu0
      %v779 = vadd.f32 %v766, %v778
      %v780 = vpop.f32.mrf.mxu0
      %781 = vdwg.mxu0
      %v782 = vmax.f32 %v727, 0.0
      %v783 = vmax.f32 %v779, 0.0
      %v784 = vpack.c.bf16 %v782, %v782
      %v785 = vpack.c.bf16 %v783, %v783
      %v786 = vld [vmem:[#allocation11] sm:$0xf]
      %v787 = vld [vmem:[#allocation11 + $0x4] sm:$0xf]
      %v788 = vld [vmem:[#allocation11 + $0x8] sm:$0xf]
      %v789 = vld [vmem:[#allocation11 + $0xc] sm:$0xf]
      %v790 = vld [vmem:[#allocation11 + $0x10] sm:$0xf]
      %v791 = vld [vmem:[#allocation11 + $0x14] sm:$0xf]
      %v792 = vld [vmem:[#allocation11 + $0x18] sm:$0xf]
      %v793 = vld [vmem:[#allocation11 + $0x1c] sm:$0xf]
      %v794 = vld [vmem:[#allocation11 + $0x20] sm:$0xf]
      %v795 = vld [vmem:[#allocation11 + $0x24] sm:$0xf]
      %v796 = vld [vmem:[#allocation11 + $0x28] sm:$0xf]
      %v797 = vld [vmem:[#allocation11 + $0x2c] sm:$0xf]
      %v798 = vld [vmem:[#allocation11 + $0x30] sm:$0xf]
      %v799 = vld [vmem:[#allocation11 + $0x34] sm:$0xf]
      %v800 = vld [vmem:[#allocation11 + $0x38] sm:$0xf]
      %v801 = vld [vmem:[#allocation11 + $0x3c] sm:$0xf]
      %v802 = vld [vmem:[#allocation11 + $0x40] sm:$0xf]
      %v803 = vld [vmem:[#allocation11 + $0x44] sm:$0xf]
      %v804 = vld [vmem:[#allocation11 + $0x48] sm:$0xf]
      %v805 = vld [vmem:[#allocation11 + $0x4c] sm:$0xf]
      %v806 = vld [vmem:[#allocation11 + $0x50] sm:$0xf]
      %v807 = vld [vmem:[#allocation11 + $0x54] sm:$0xf]
      %v808 = vld [vmem:[#allocation11 + $0x58] sm:$0xf]
      %v809 = vld [vmem:[#allocation11 + $0x5c] sm:$0xf]
      %v810 = vld [vmem:[#allocation11 + $0x60] sm:$0xf]
      %v811 = vld [vmem:[#allocation11 + $0x64] sm:$0xf]
      %v812 = vld [vmem:[#allocation11 + $0x68] sm:$0xf]
      %v813 = vld [vmem:[#allocation11 + $0x6c] sm:$0xf]
      %v814 = vld [vmem:[#allocation11 + $0x70] sm:$0xf]
      %v815 = vld [vmem:[#allocation11 + $0x74] sm:$0xf]
      %v816 = vld [vmem:[#allocation11 + $0x78] sm:$0xf]
      %v817 = vld [vmem:[#allocation11 + $0x7c] sm:$0xf]
      %v818 = vld [vmem:[%s6] sm:$0x1]
      %v820 = vperm.slane %v818, 0
      %v854 = vunpack.c.l.b16 %v786
      %v855 = vunpack.c.l.b16 %v787
      %v856 = vunpack.c.l.b16 %v788
      %v857 = vunpack.c.l.b16 %v789
      %v858 = vunpack.c.l.b16 %v790
      %v859 = vunpack.c.l.b16 %v791
      %v860 = vunpack.c.l.b16 %v792
      %v861 = vunpack.c.l.b16 %v793
      %v862 = vunpack.c.l.b16 %v794
      %v863 = vunpack.c.l.b16 %v795
      %v864 = vunpack.c.l.b16 %v796
      %v865 = vunpack.c.l.b16 %v797
      %v866 = vunpack.c.l.b16 %v798
      %v867 = vunpack.c.l.b16 %v799
      %v868 = vunpack.c.l.b16 %v800
      %v869 = vunpack.c.l.b16 %v801
      %v870 = vunpack.c.l.b16 %v802
      %v871 = vunpack.c.l.b16 %v803
      %v872 = vunpack.c.l.b16 %v804
      %v873 = vunpack.c.l.b16 %v805
      %v874 = vunpack.c.l.b16 %v806
      %v875 = vunpack.c.l.b16 %v807
      %v876 = vunpack.c.l.b16 %v808
      %v877 = vunpack.c.l.b16 %v809
      %v878 = vunpack.c.l.b16 %v810
      %v879 = vunpack.c.l.b16 %v811
      %v880 = vunpack.c.l.b16 %v812
      %v881 = vunpack.c.l.b16 %v813
      %v882 = vunpack.c.l.b16 %v814
      %v883 = vunpack.c.l.b16 %v815
      %v884 = vunpack.c.l.b16 %v816
      %v885 = vunpack.c.l.b16 %v817
      %v886 = vpack.c.b16 %v855, %v854
      %v887 = vpack.c.b16 %v857, %v856
      %v888 = vpack.c.b16 %v859, %v858
      %v889 = vpack.c.b16 %v861, %v860
      %v890 = vpack.c.b16 %v863, %v862
      %v891 = vpack.c.b16 %v865, %v864
      %v892 = vpack.c.b16 %v867, %v866
      %v893 = vpack.c.b16 %v869, %v868
      %v894 = vpack.c.b16 %v871, %v870
      %v895 = vpack.c.b16 %v873, %v872
      %v896 = vpack.c.b16 %v875, %v874
      %v897 = vpack.c.b16 %v877, %v876
      %v898 = vpack.c.b16 %v879, %v878
      %v899 = vpack.c.b16 %v881, %v880
      %v900 = vpack.c.b16 %v883, %v882
      %v901 = vpack.c.b16 %v885, %v884
      %918 = vmatpush.bf16.msra.mxu0 %v893
      %919 = vmatpush.bf16.msra.mxu0 %v892
      %920 = vmatpush.bf16.msra.mxu0 %v891
      %921 = vmatpush.bf16.msra.mxu0 %v890
      %922 = vmatpush.bf16.msra.mxu0 %v889
      %923 = vmatpush.bf16.msra.mxu0 %v888
      %924 = vmatpush.bf16.msra.mxu0 %v887
      %925 = vmatpush.bf16.msra.mxu0 %v886
      %926 = vmatmul.bf16.gmra.mxu0 %v784
      %v927 = vpop.f32.mrf.mxu0
      %v928 = vadd.f32 %v820, %v927
      %v929 = vpop.f32.mrf.mxu0
      %930 = vdwg.mxu0
      %931 = vmatpush.bf16.msra.mxu0 %v901
      %932 = vmatpush.bf16.msra.mxu0 %v900
      %933 = vmatpush.bf16.msra.mxu0 %v899
      %934 = vmatpush.bf16.msra.mxu0 %v898
      %935 = vmatpush.bf16.msra.mxu0 %v897
      %936 = vmatpush.bf16.msra.mxu0 %v896
      %937 = vmatpush.bf16.msra.mxu0 %v895
      %938 = vmatpush.bf16.msra.mxu0 %v894
      %939 = vmatmul.bf16.gmra.mxu0 %v785
      %v940 = vpop.f32.mrf.mxu0
      %v941 = vadd.f32 %v928, %v940
      %v942 = vpop.f32.mrf.mxu0
      %943 = vdwg.mxu0
      %944 = vst [vmem:[#allocation12] sm:$0xff] %v941
    $region57: #{tpu_custom_call.1} parent=1 // pred_fallthru
      _
    // Predicated region
    $region58: #{tpu_custom_call.1} parent=1 // pred_check
      _
    $region59: #{tpu_custom_call.1} parent=1 // pred_check_branch
      %946 = sbr.rel (0) target = $region61
    $region60: #{tpu_custom_call.1} parent=1 // pred_region
      %948 = vsyncadd [#allocation5], 0
      %s950 = sshll.u32 [#allocation12], 4
      %s951 = int_to_ptr.vmem [resolvable:$true] %s950
      %s952 = sshll.u32 %s7, 4
      %s953 = int_to_ptr.hbm [resolvable:$true] %s952
      %955 = dma.vmem_to_hbm [thread:$0]  %s951, 128, %s953, [#allocation5]
    $region61: #{tpu_custom_call.1} parent=1 // pred_fallthru
      _
    // Predicated region
    $region62: #{tpu_custom_call.1} parent=1 // pred_check
      _
    $region63: #{tpu_custom_call.1} parent=1 // pred_check_branch
      %957 = sbr.rel (0) target = $region65
    $region64: #{tpu_custom_call.1} parent=1 // pred_region
      %959 = dma.done [#allocation5], 128
    $region65: #{tpu_custom_call.1} parent=1 // pred_fallthru
      _
    %960 = vsyncpa [#allocation4], 1
    %961 = vsyncpa [#allocation7], 1
    %962 = vsyncpa [#allocation10], 1
    %963 = vsyncpa [#allocation5], 1

</llo_original>
